<compile_context>
chip_gen: v7x
topology: tpu7x:2x2x1
jax: 0.10.0
libtpu: 0.0.40
codegen_flags: <defaults>
</compile_context>

<pallas_src>
import functools

import jax
import jax.numpy as jnp
from jax.experimental import pallas as pl
from jax.experimental.pallas import tpu as pltpu

_LANE = 128                               # lane width (last dim)
_SUBLANE = 8                              # f32 sublane group (2nd-to-last dim)
_MAX_TM = 2048                            # batch-tile upper bound
_STREAM_VMEM_BUDGET = 16 * 1024 * 1024    # budget for double-buffered x/out tiles
_VMEM_LIMIT_CAP = 56 * 1024 * 1024        # stay inside v7x's 64 MiB physical VMEM
_VMEM_LIMIT_FLOOR = 16 * 1024 * 1024


def _round_up(n, m):
    return ((n + m - 1) // m) * m


@functools.lru_cache(maxsize=1)
def _resident_buffer_count():
    """Returns 1 if single-buffered (pl.Buffered(1)) resident BlockSpecs lower
    cleanly on this jax/libtpu; otherwise 2 (default double buffering)."""
    def _copy(x_ref, o_ref):
        o_ref[...] = x_ref[...]

    try:
        spec = pl.BlockSpec((_SUBLANE, _LANE), lambda i: (0, 0),
                            pipeline_mode=pl.Buffered(1))
        out = pl.pallas_call(
            _copy,
            out_shape=jax.ShapeDtypeStruct((_SUBLANE, _LANE), jnp.float32),
            grid=(2,),
            in_specs=[spec],
            out_specs=pl.BlockSpec((_SUBLANE, _LANE), lambda i: (0, 0)),
            compiler_params=pltpu.CompilerParams(
                dimension_semantics=("parallel",)),
        )(jnp.zeros((_SUBLANE, _LANE), jnp.float32))
        jax.block_until_ready(out)
        return 1
    except Exception:  # pragma: no cover - older jax without pipeline_mode
        return 2


def _make_mlp_kernel(num_layers, matmul_dtype):
    """Fused MLP kernel body: refs = (x, W1..Wn, b1..bn, out)."""

    def kernel(*refs):
        x_ref = refs[0]
        w_refs = refs[1:1 + num_layers]
        b_refs = refs[1 + num_layers:1 + 2 * num_layers]
        out_ref = refs[1 + 2 * num_layers]

        h = x_ref[...]
        for i in range(num_layers):
            # Weights were pre-cast in the wrapper; only the activation (lhs)
            # ever needs an in-kernel cast (bf16 path on v6e/v7x).
            lhs = h if h.dtype == matmul_dtype else h.astype(matmul_dtype)
            h = jnp.dot(lhs, w_refs[i][...], preferred_element_type=jnp.float32)
            h = h + b_refs[i][...]          # bias add stays f32 on the VPU
            if i < num_layers - 1:
                h = jnp.maximum(h, 0.0)
        out_ref[...] = h.astype(out_ref.dtype)

    return kernel


def init_net_params(key, input_size, hidden_sizes, num_outputs, dtype=jnp.float32):
    """PyTorch-style uniform(+/- 1/sqrt(fan_in)) init.

    Weights are stored transposed as (in, out); biases as (1, out).
    """
    dims = [input_size] + list(hidden_sizes) + [num_outputs]
    weights, biases = [], []
    for i in range(len(dims) - 1):
        fan_in, fan_out = dims[i], dims[i + 1]
        key, kw, kb = jax.random.split(key, 3)
        bound = 1.0 / jnp.sqrt(jnp.array(fan_in, dtype=jnp.float32))
        w = jax.random.uniform(kw, (fan_in, fan_out), dtype, -bound, bound)
        b = jax.random.uniform(kb, (1, fan_out), dtype, -bound, bound)
        weights.append(w)
        biases.append(b)
    return weights, biases


def _choose_batch_tiling(batch, pdim_in, pdim_out, x_itemsize, out_itemsize):
    """Balanced batch tiling: (tile rows, number of tiles)."""
    # Largest tile the streaming budget allows (x/out are double buffered).
    per_row = 2 * (pdim_in * x_itemsize + pdim_out * out_itemsize)
    vmem_tm = max(_SUBLANE, (_STREAM_VMEM_BUDGET // per_row) // _SUBLANE * _SUBLANE)
    max_tm = min(_MAX_TM, vmem_tm)
    # Balanced tile count (avoids a mostly-padded last tile).
    num_tiles = pl.cdiv(batch, max_tm)
    # v7x megacore: an even grid count splits the "parallel" axis evenly across
    # the two TensorCores; no effect on v5e/v6e (single TC, tiny extra step).
    if batch >= 2 * _SUBLANE and num_tiles % 2 == 1:
        num_tiles += 1
    tm = _round_up(pl.cdiv(batch, num_tiles), _SUBLANE)
    return tm, num_tiles


@functools.partial(jax.jit, static_argnames=("matmul_dtype", "resident_bufs"))
def _net_forward_impl(x, weights, biases, matmul_dtype, resident_bufs):
    num_layers = len(weights)
    batch, in_dim = x.shape
    num_outputs = weights[-1].shape[1]
    out_dtype = x.dtype

    # Lane-dense (128-padded) feature dims for every layer boundary.
    dims = [in_dim] + [w.shape[1] for w in weights]
    pdims = [_round_up(d, _LANE) for d in dims]

    # Stream x in the MXU operand dtype when it is narrower (halves HBM bytes).
    if jnp.dtype(matmul_dtype).itemsize < jnp.dtype(x.dtype).itemsize:
        x_stream_dtype = jnp.dtype(matmul_dtype)
    else:
        x_stream_dtype = jnp.dtype(x.dtype)
    x_itemsize = x_stream_dtype.itemsize
    out_itemsize = jnp.dtype(out_dtype).itemsize

    tm, num_tiles = _choose_batch_tiling(batch, pdims[0], pdims[-1],
                                         x_itemsize, out_itemsize)
    batch_p = tm * num_tiles

    # Zero-pad.  Padded input columns and padded weight rows/cols are zero, so
    # the padded lanes contribute exactly 0 -> valid output columns unchanged.
    x_p = jnp.pad(x, ((0, batch_p - batch),
                      (0, pdims[0] - in_dim))).astype(x_stream_dtype)
    weights_p = tuple(
        jnp.pad(w, ((0, pdims[i] - w.shape[0]),
                    (0, pdims[i + 1] - w.shape[1]))).astype(matmul_dtype)
        for i, w in enumerate(weights))                 # pre-cast once, outside kernel
    biases_p = tuple(
        jnp.pad(b, ((0, 0), (0, pdims[i + 1] - b.shape[1]))).astype(jnp.float32)
        for i, b in enumerate(biases))

    kernel = _make_mlp_kernel(num_layers, matmul_dtype)

    # Resident operands (constant index_map) only need a single pipeline buffer.
    if resident_bufs == 1:
        def resident_spec(shape):
            return pl.BlockSpec(shape, lambda i: (0, 0),
                                pipeline_mode=pl.Buffered(1))
    else:
        def resident_spec(shape):
            return pl.BlockSpec(shape, lambda i: (0, 0))

    in_specs = [pl.BlockSpec((tm, pdims[0]), lambda i: (i, 0))]
    in_specs += [resident_spec(w.shape) for w in weights_p]
    in_specs += [resident_spec(b.shape) for b in biases_p]
    out_specs = pl.BlockSpec((tm, pdims[-1]), lambda i: (i, 0))

    # Cost estimate with per-array byte counts (weights may be narrower than x).
    flops = 2 * batch_p * sum(pdims[i] * pdims[i + 1] for i in range(num_layers))
    bytes_accessed = (
        x_p.size * x_p.dtype.itemsize
        + sum(w.size * w.dtype.itemsize for w in weights_p)
        + sum(b.size * b.dtype.itemsize for b in biases_p)
        + batch_p * pdims[-1] * out_itemsize)
    cost = pl.CostEstimate(flops=flops, transcendentals=0,
                           bytes_accessed=bytes_accessed)

    # Actual VMEM footprint + headroom, capped below v7x's 64 MiB physical VMEM.
    stream_bytes = 2 * tm * (pdims[0] * x_itemsize + pdims[-1] * out_itemsize)
    resident_bytes = resident_bufs * (
        sum(w.size * w.dtype.itemsize for w in weights_p)
        + sum(b.size * b.dtype.itemsize for b in biases_p))
    act_bytes = 2 * tm * max(pdims) * 4       # f32 intermediate activations
    vmem_limit = stream_bytes + resident_bytes + act_bytes + (8 << 20)
    vmem_limit = int(max(_VMEM_LIMIT_FLOOR, min(_VMEM_LIMIT_CAP, vmem_limit)))

    # TODO(synk): for hidden sizes whose padded weights no longer fit resident
    # in VMEM (~24 MiB on v7x), add a K-reduction grid axis ("arbitrary", last)
    # with an f32 VMEM accumulator instead of whole-weight-resident blocks.

    out_p = pl.pallas_call(
        kernel,
        out_shape=jax.ShapeDtypeStruct((batch_p, pdims[-1]), out_dtype),
        grid=(num_tiles,),
        in_specs=in_specs,
        out_specs=out_specs,
        compiler_params=pltpu.CompilerParams(
            dimension_semantics=("parallel",),     # both TCs on v7x
            vmem_limit_bytes=vmem_limit),
        cost_estimate=cost,
    )(x_p, *weights_p, *biases_p)

    # Strip batch / feature padding.
    return out_p[:batch, :num_outputs]


def net_forward(x, weights, biases, matmul_dtype=jnp.float32):
    """Equivalent of _Net.forward.

    matmul_dtype=jnp.bfloat16 casts MXU operands (weights in the wrapper, x on
    the stream, activations in-kernel) with f32 accumulation - recommended on
    v6e/v7x.  Keep the f32 default on v5e or when bit-closeness to the f32
    reference is required.
    """
    return _net_forward_impl(x, tuple(weights), tuple(biases),
                             matmul_dtype=matmul_dtype,
                             resident_bufs=_resident_buffer_count())


def _net_forward_ref(x, weights, biases):
    h = x.astype(jnp.float32)
    for i, (w, b) in enumerate(zip(weights, biases)):
        h = h @ w + b
        if i < len(weights) - 1:
            h = jnp.maximum(h, 0.0)
    return h.astype(x.dtype)


def _run_case(key, batch, input_size, hidden_sizes, num_outputs,
              matmul_dtype=jnp.float32, atol=1e-5, rtol=1e-5):
    key, kx, kp = jax.random.split(key, 3)
    x = jax.random.normal(kx, (batch, input_size), jnp.float32)
    weights, biases = init_net_params(kp, input_size, hidden_sizes, num_outputs)

    out = jax.block_until_ready(net_forward(x, weights, biases, matmul_dtype))
    ref = _net_forward_ref(x, weights, biases)

    assert out.shape == (batch, num_outputs), out.shape
    assert jnp.allclose(out, ref, atol=atol, rtol=rtol), (
        f"mismatch for batch={batch}, hidden={hidden_sizes}, "
        f"matmul_dtype={jnp.dtype(matmul_dtype).name}")
    return key


if __name__ == "__main__":
    key = jax.random.PRNGKey(0)

    # netsize == 2 (fc1 -> relu -> fc2 -> relu -> fc3), small shapes.
    key = _run_case(key, batch=4, input_size=32, hidden_sizes=(64, 48),
                    num_outputs=8)
    # netsize == 0 (single Linear).
    key = _run_case(key, batch=6, input_size=24, hidden_sizes=(),
                    num_outputs=10)
    # Larger batch: balanced 2-tile grid (even count for v7x) + edge padding.
    key = _run_case(key, batch=1050, input_size=32, hidden_sizes=(64, 48),
                    num_outputs=8)
    # bf16 MXU-operand path (v6e/v7x recommendation); f32 accumulation, so a
    # relaxed tolerance against the f32 reference.
    key = _run_case(key, batch=260, input_size=32, hidden_sizes=(64, 48),
                    num_outputs=8, matmul_dtype=jnp.bfloat16,
                    atol=5e-2, rtol=5e-2)

    print("KERNEL_OK")
</pallas_src>

<mosaic_0001>
module attributes {stable_mosaic.version = 11 : i64} {
  func.func @_copy(%arg0: i32, %arg1: memref<8x128xf32, #tpu.memory_space<vmem>>, %arg2: memref<8x128xf32, #tpu.memory_space<vmem>>) attributes {dimension_semantics = [#tpu.dimension_semantics<parallel>], iteration_bounds = array<i64: 2>, scalar_prefetch = 0 : i64, scratch_operands = 0 : i64, tpu.core_type = #tpu.core_type<tc>, window_params = [{pipeline_mode = #tpu.pipeline_mode<synchronous>, transform_indices = @transform_0, window_bounds = array<i64: 8, 128>}, {pipeline_mode = #tpu.pipeline_mode<synchronous>, transform_indices = @transform_1, window_bounds = array<i64: 8, 128>}]} {
    %c0 = arith.constant 0 : index
    %c0_0 = arith.constant 0 : index
    %0 = vector.load %arg1[%c0, %c0_0] : memref<8x128xf32, #tpu.memory_space<vmem>>, vector<8x128xf32>
    %c0_1 = arith.constant 0 : index
    %c0_2 = arith.constant 0 : index
    %1 = vector.load %arg2[%c0_1, %c0_2] : memref<8x128xf32, #tpu.memory_space<vmem>>, vector<8x128xf32>
    tpu.vector_store %arg2[%c0_1, %c0_2], %0 {strides = array<i32>} : memref<8x128xf32, #tpu.memory_space<vmem>>, vector<8x128xf32>,
    return
  }
  func.func @transform_0(%arg0: i32) -> (i32, i32) {
    %c0_i32 = arith.constant 0 : i32
    %c0_i32_0 = arith.constant 0 : i32
    %c0_i32_1 = arith.constant 0 : i32
    return %c0_i32, %c0_i32_0 : i32, i32
  }
  func.func @transform_1(%arg0: i32) -> (i32, i32) {
    %c0_i32 = arith.constant 0 : i32
    %c0_i32_0 = arith.constant 0 : i32
    %c0_i32_1 = arith.constant 0 : i32
    return %c0_i32, %c0_i32_0 : i32, i32
  }
}

module attributes {stable_mosaic.version = 11 : i64} {
  func.func @kernel(%arg0: i32, %arg1: memref<8x128xf32, #tpu.memory_space<vmem>>, %arg2: memref<128x128xf32, #tpu.memory_space<vmem>>, %arg3: memref<128x128xf32, #tpu.memory_space<vmem>>, %arg4: memref<128x128xf32, #tpu.memory_space<vmem>>, %arg5: memref<1x128xf32, #tpu.memory_space<vmem>>, %arg6: memref<1x128xf32, #tpu.memory_space<vmem>>, %arg7: memref<1x128xf32, #tpu.memory_space<vmem>>, %arg8: memref<8x128xf32, #tpu.memory_space<vmem>>) attributes {dimension_semantics = [#tpu.dimension_semantics<parallel>], iteration_bounds = array<i64: 1>, scalar_prefetch = 0 : i64, scratch_operands = 0 : i64, tpu.core_type = #tpu.core_type<tc>, window_params = [{transform_indices = @transform_0, window_bounds = array<i64: 8, 128>}, {pipeline_mode = #tpu.pipeline_mode<synchronous>, transform_indices = @transform_1, window_bounds = array<i64: 128, 128>}, {pipeline_mode = #tpu.pipeline_mode<synchronous>, transform_indices = @transform_2, window_bounds = array<i64: 128, 128>}, {pipeline_mode = #tpu.pipeline_mode<synchronous>, transform_indices = @transform_3, window_bounds = array<i64: 128, 128>}, {pipeline_mode = #tpu.pipeline_mode<synchronous>, transform_indices = @transform_4, window_bounds = array<i64: 1, 128>}, {pipeline_mode = #tpu.pipeline_mode<synchronous>, transform_indices = @transform_5, window_bounds = array<i64: 1, 128>}, {pipeline_mode = #tpu.pipeline_mode<synchronous>, transform_indices = @transform_6, window_bounds = array<i64: 1, 128>}, {transform_indices = @transform_7, window_bounds = array<i64: 8, 128>}]} {
    %c0 = arith.constant 0 : index
    %c0_0 = arith.constant 0 : index
    %0 = vector.load %arg1[%c0, %c0_0] : memref<8x128xf32, #tpu.memory_space<vmem>>, vector<8x128xf32>
    %c0_1 = arith.constant 0 : index
    %c0_2 = arith.constant 0 : index
    %1 = vector.load %arg2[%c0_1, %c0_2] : memref<128x128xf32, #tpu.memory_space<vmem>>, vector<128x128xf32>
    %cst = arith.constant dense<0.000000e+00> : vector<8x128xf32>
    %2 = tpu.matmul %0, %1, %cst {dimension_numbers = #tpu.dot_dimension_numbers<[1], [0], [0], [1], [0, 0, 1, 1], [], []>} : vector<8x128xf32>, vector<128x128xf32>, vector<8x128xf32> -> vector<8x128xf32>
    %c0_3 = arith.constant 0 : index
    %c0_4 = arith.constant 0 : index
    %3 = vector.load %arg5[%c0_3, %c0_4] : memref<1x128xf32, #tpu.memory_space<vmem>>, vector<1x128xf32>
    %4 = vector.broadcast %3 : vector<1x128xf32> to vector<8x128xf32>
    %5 = arith.addf %2, %4 : vector<8x128xf32>
    %cst_5 = arith.constant 0.000000e+00 : f32
    %6 = vector.broadcast %cst_5 : f32 to vector<8x128xf32>
    %7 = arith.maximumf %5, %6 : vector<8x128xf32>
    %c0_6 = arith.constant 0 : index
    %c0_7 = arith.constant 0 : index
    %8 = vector.load %arg3[%c0_6, %c0_7] : memref<128x128xf32, #tpu.memory_space<vmem>>, vector<128x128xf32>
    %cst_8 = arith.constant dense<0.000000e+00> : vector<8x128xf32>
    %9 = tpu.matmul %7, %8, %cst_8 {dimension_numbers = #tpu.dot_dimension_numbers<[1], [0], [0], [1], [0, 0, 1, 1], [], []>} : vector<8x128xf32>, vector<128x128xf32>, vector<8x128xf32> -> vector<8x128xf32>
    %c0_9 = arith.constant 0 : index
    %c0_10 = arith.constant 0 : index
    %10 = vector.load %arg6[%c0_9, %c0_10] : memref<1x128xf32, #tpu.memory_space<vmem>>, vector<1x128xf32>
    %11 = vector.broadcast %10 : vector<1x128xf32> to vector<8x128xf32>
    %12 = arith.addf %9, %11 : vector<8x128xf32>
    %cst_11 = arith.constant 0.000000e+00 : f32
    %13 = vector.broadcast %cst_11 : f32 to vector<8x128xf32>
    %14 = arith.maximumf %12, %13 : vector<8x128xf32>
    %c0_12 = arith.constant 0 : index
    %c0_13 = arith.constant 0 : index
    %15 = vector.load %arg4[%c0_12, %c0_13] : memref<128x128xf32, #tpu.memory_space<vmem>>, vector<128x128xf32>
    %cst_14 = arith.constant dense<0.000000e+00> : vector<8x128xf32>
    %16 = tpu.matmul %14, %15, %cst_14 {dimension_numbers = #tpu.dot_dimension_numbers<[1], [0], [0], [1], [0, 0, 1, 1], [], []>} : vector<8x128xf32>, vector<128x128xf32>, vector<8x128xf32> -> vector<8x128xf32>
    %c0_15 = arith.constant 0 : index
    %c0_16 = arith.constant 0 : index
    %17 = vector.load %arg7[%c0_15, %c0_16] : memref<1x128xf32, #tpu.memory_space<vmem>>, vector<1x128xf32>
    %18 = vector.broadcast %17 : vector<1x128xf32> to vector<8x128xf32>
    %19 = arith.addf %16, %18 : vector<8x128xf32>
    %c0_17 = arith.constant 0 : index
    %c0_18 = arith.constant 0 : index
    %20 = vector.load %arg8[%c0_17, %c0_18] : memref<8x128xf32, #tpu.memory_space<vmem>>, vector<8x128xf32>
    tpu.vector_store %arg8[%c0_17, %c0_18], %19 {strides = array<i32>} : memref<8x128xf32, #tpu.memory_space<vmem>>, vector<8x128xf32>,
    return
  }
  func.func @transform_0(%arg0: i32) -> (i32, i32) {
    %c0_i32 = arith.constant 0 : i32
    %c0_i32_0 = arith.constant 0 : i32
    return %arg0, %c0_i32 : i32, i32
  }
  func.func @transform_1(%arg0: i32) -> (i32, i32) {
    %c0_i32 = arith.constant 0 : i32
    %c0_i32_0 = arith.constant 0 : i32
    %c0_i32_1 = arith.constant 0 : i32
    return %c0_i32, %c0_i32_0 : i32, i32
  }
  func.func @transform_2(%arg0: i32) -> (i32, i32) {
    %c0_i32 = arith.constant 0 : i32
    %c0_i32_0 = arith.constant 0 : i32
    %c0_i32_1 = arith.constant 0 : i32
    return %c0_i32, %c0_i32_0 : i32, i32
  }
  func.func @transform_3(%arg0: i32) -> (i32, i32) {
    %c0_i32 = arith.constant 0 : i32
    %c0_i32_0 = arith.constant 0 : i32
    %c0_i32_1 = arith.constant 0 : i32
    return %c0_i32, %c0_i32_0 : i32, i32
  }
  func.func @transform_4(%arg0: i32) -> (i32, i32) {
    %c0_i32 = arith.constant 0 : i32
    %c0_i32_0 = arith.constant 0 : i32
    %c0_i32_1 = arith.constant 0 : i32
    return %c0_i32, %c0_i32_0 : i32, i32
  }
  func.func @transform_5(%arg0: i32) -> (i32, i32) {
    %c0_i32 = arith.constant 0 : i32
    %c0_i32_0 = arith.constant 0 : i32
    %c0_i32_1 = arith.constant 0 : i32
    return %c0_i32, %c0_i32_0 : i32, i32
  }
  func.func @transform_6(%arg0: i32) -> (i32, i32) {
    %c0_i32 = arith.constant 0 : i32
    %c0_i32_0 = arith.constant 0 : i32
    %c0_i32_1 = arith.constant 0 : i32
    return %c0_i32, %c0_i32_0 : i32, i32
  }
  func.func @transform_7(%arg0: i32) -> (i32, i32) {
    %c0_i32 = arith.constant 0 : i32
    %c0_i32_0 = arith.constant 0 : i32
    return %arg0, %c0_i32 : i32, i32
  }
}

</mosaic_0001>

<llo_original>
// kernel: tpu_custom_call.1
$region0: #{tpu_custom_call.1}
  #allocation0 [shape = 'u32[]', space=smem, size = 0x4, offset = 0x4, fixed_abs, tag = 'smem constant byte address 0x4 - core index']
  #allocation1 [shape = 'u32[144,128]{1,0:T(1,128)}', space=vmem, size = 0x12000, scoped, tag = 'internal scratch']
  %s0 = inlined_call_operand.hbm [shape: f32[8,128], index: 0, kind: input, shape index: {}]
  %s1 = inlined_call_operand.hbm [shape: f32[8,128], index: 1, kind: output, shape index: {}]
  %s2 = sld [smem:[#allocation0]]
  $region41: #{tpu_custom_call.1} parent=0
    _
  %s4 = ssub.s32 1, %s2
  %s5 = scalar_select 0, %s4, %s2
  $region1: #{tpu_custom_call.1} parent=0
    #allocation2 [shape = 'u8[4096]{0}', space=vmem, size = 0x1000, scoped, tag = 'input window, operand 0, single buffered']
    #allocation3 [shape = 's32[2]{0}', space=sflag, size = 0x8, scoped, tag = 'scoped memory for tpu_custom_call.1']
    #allocation4 [shape = 's32[2]{0}', space=sflag, size = 0x8, scoped, tag = 'scoped memory for tpu_custom_call.1']
    #allocation5 [shape = 'u8[4096]{0}', space=vmem, size = 0x1000, scoped, tag = 'output window, operand 0, single buffered']
    %6 = vsyncpa [#allocation3], 0
    %7 = vsyncpa [#allocation4], 0
    loop: start=0, step=1, limit=4
    $region2: #{tpu_custom_call.1} parent=1 // loop_pre_header
      _
    $region3: #{tpu_custom_call.1} parent=1 // loop_header
      %s9 = sphi 0, %s13
      %p10 = scmp.ge.s32.totalorder %s9, 4
      %s17 = sphi 0, %s17
      %s19 = sphi 0, %s17
      %s20 = sphi 0, %s19
      %s34 = sphi 0, %s20
      %s38 = sphi 0, %s38
      %s40 = sphi 0, %s38
      %s41 = sphi 0, %s40
      %s55 = sphi 0, %s41
    $region4: #{tpu_custom_call.1} parent=1 // loop_header_branch
      %12 = sbr.rel (%p10) target = $region8
    $region5: #{tpu_custom_call.1} parent=1 // loop_body
      %s14 = ssub.s32 %s9, 1
      %s15 = ssub.s32 %s9, 2
      %s16 = sadd.s32 %s9, 1
      %s18 = sadd.s32 %s17, 1
      %p21 = scmp.eq.s32.totalorder %s9, 1
      %p22 = scmp.ne.s32.totalorder %s17, %s19
      %p23 = scmp.eq.s32.totalorder %s9, 0
      %p24 = por %p22, %p23
      %p25 = scmp.ne.s32.totalorder %s17, %s19
      %p26 = scmp.eq.s32.totalorder %s14, 1
      %p27 = por %p25, %p26
      %p28 = scmp.ne.s32.totalorder %s19, %s20
      %p29 = scmp.eq.s32.totalorder %s14, 0
      %p30 = por %p28, %p29
      %p31 = scmp.ne.s32.totalorder %s19, %s20
      %p32 = scmp.eq.s32.totalorder %s15, 1
      %p33 = por %p31, %p32
      %p35 = scmp.ne.s32.totalorder %s20, %s34
      %p36 = scmp.eq.s32.totalorder %s15, 0
      %p37 = por %p35, %p36
      %s39 = sadd.s32 %s38, 1
      %p42 = scmp.eq.s32.totalorder %s9, 1
      %p43 = scmp.ne.s32.totalorder %s38, %s40
      %p44 = scmp.eq.s32.totalorder %s9, 0
      %p45 = por %p43, %p44
      %p46 = scmp.ne.s32.totalorder %s38, %s40
      %p47 = scmp.eq.s32.totalorder %s14, 1
      %p48 = por %p46, %p47
      %p49 = scmp.ne.s32.totalorder %s40, %s41
      %p50 = scmp.eq.s32.totalorder %s14, 0
      %p51 = por %p49, %p50
      %p52 = scmp.ne.s32.totalorder %s40, %s41
      %p53 = scmp.eq.s32.totalorder %s15, 1
      %p54 = por %p52, %p53
      %p56 = scmp.ne.s32.totalorder %s41, %s55
      %p57 = scmp.eq.s32.totalorder %s15, 0
      %p58 = por %p56, %p57
      %p59 = scmp.le.s32.totalorder 1, %s9
      %p60 = scmp.lt.s32.totalorder %s9, 3
      %p61 = pnand %p59, %p60
      %p62 = pneg %p61
      // Predicated region
      $region9: #{tpu_custom_call.1} parent=5 // pred_check
        _
      $region10: #{tpu_custom_call.1} parent=5 // pred_check_branch
        %64 = sbr.rel (%p61) target = $region12
      $region11: #{tpu_custom_call.1} parent=5 // pred_region
        %s65 = ssub.s32 %s9, 1
        // Predicated region
        $region13: #{tpu_custom_call.1} parent=11 // pred_check
          %p66 = pneg %p30
        $region14: #{tpu_custom_call.1} parent=11 // pred_check_branch
          %68 = sbr.rel (%p66) target = $region16
        $region15: #{tpu_custom_call.1} parent=11 // pred_region
          %s70 = ssub.s32 128, 128
          %71 = vsyncadd [#allocation3], %s70
          %s73 = sshll.u32 [#allocation2], 4
          %s74 = int_to_ptr.vmem [resolvable:$true] %s73
          %76 = dma.hbm_to_vmem [thread:$0]  %s0, 128, %s74, [#allocation3]
        $region16: #{tpu_custom_call.1} parent=11 // pred_fallthru
          _
      $region12: #{tpu_custom_call.1} parent=5 // pred_fallthru
        _
      %p77 = scmp.lt.s32.totalorder %s9, 2
      // Predicated region
      $region17: #{tpu_custom_call.1} parent=5 // pred_check
        %p78 = pneg %p77
      $region18: #{tpu_custom_call.1} parent=5 // pred_check_branch
        %80 = sbr.rel (%p78) target = $region20
      $region19: #{tpu_custom_call.1} parent=5 // pred_region
        _
      $region20: #{tpu_custom_call.1} parent=5 // pred_fallthru
        _
      %p81 = scmp.le.s32.totalorder 1, %s9
      %p82 = scmp.lt.s32.totalorder %s9, 3
      %p83 = pnand %p81, %p82
      %p84 = pneg %p83
      // Predicated region
      $region21: #{tpu_custom_call.1} parent=5 // pred_check
        _
      $region22: #{tpu_custom_call.1} parent=5 // pred_check_branch
        %86 = sbr.rel (%p83) target = $region24
      $region23: #{tpu_custom_call.1} parent=5 // pred_region
        %s87 = ssub.s32 %s9, 1
        // Predicated region
        $region25: #{tpu_custom_call.1} parent=23 // pred_check
          %p88 = pneg %p30
        $region26: #{tpu_custom_call.1} parent=23 // pred_check_branch
          %90 = sbr.rel (%p88) target = $region28
        $region27: #{tpu_custom_call.1} parent=23 // pred_region
          %91 = dma.done [#allocation3], 128
        $region28: #{tpu_custom_call.1} parent=23 // pred_fallthru
          _
        %p92 = pneg %p30
        %p93 = pneg %p27
        %p94 = pneg %p51
        %p95 = pneg %p48
        %v96 = vld [vmem:[#allocation2] sm:$0xff]
        %97 = vst [vmem:[#allocation5] sm:$0xff] %v96
        // Predicated region
        $region29: #{tpu_custom_call.1} parent=23 // pred_check
          %p98 = pneg %p48
        $region30: #{tpu_custom_call.1} parent=23 // pred_check_branch
          %100 = sbr.rel (%p98) target = $region32
        $region31: #{tpu_custom_call.1} parent=23 // pred_region
          %s102 = ssub.s32 128, 128
          %103 = vsyncadd [#allocation4], %s102
          %s105 = sshll.u32 [#allocation5], 4
          %s106 = int_to_ptr.vmem [resolvable:$true] %s105
          %108 = dma.vmem_to_hbm [thread:$0]  %s106, 128, %s1, [#allocation4]
        $region32: #{tpu_custom_call.1} parent=23 // pred_fallthru
          _
        // Predicated region
        $region33: #{tpu_custom_call.1} parent=23 // pred_check
          %p109 = pneg %p48
        $region34: #{tpu_custom_call.1} parent=23 // pred_check_branch
          %111 = sbr.rel (%p109) target = $region36
        $region35: #{tpu_custom_call.1} parent=23 // pred_region
          %112 = dma.done [#allocation4], 128
        $region36: #{tpu_custom_call.1} parent=23 // pred_fallthru
          _
      $region24: #{tpu_custom_call.1} parent=5 // pred_fallthru
        _
      %p113 = scmp.le.s32.totalorder 2, %s9
      // Predicated region
      $region37: #{tpu_custom_call.1} parent=5 // pred_check
        %p114 = pneg %p113
      $region38: #{tpu_custom_call.1} parent=5 // pred_check_branch
        %116 = sbr.rel (%p114) target = $region40
      $region39: #{tpu_custom_call.1} parent=5 // pred_region
        %s117 = ssub.s32 %s9, 2
      $region40: #{tpu_custom_call.1} parent=5 // pred_fallthru
        _
    $region6: #{tpu_custom_call.1} parent=1 // loop_footer
      %s13 = sadd.s32 1, %s9
    $region7: #{tpu_custom_call.1} parent=1 // loop_footer_branch
      %8 = sbr.rel target = $region3
    $region8: #{tpu_custom_call.1} parent=1 // loop_exit
      _
    %118 = vsyncpa [#allocation3], 1
    %s119 = scalar_lea.sflag [#allocation3], 1
    %120 = vsyncpa %s119, 1
    %121 = vsyncpa [#allocation4], 1
    %s122 = scalar_lea.sflag [#allocation4], 1
    %123 = vsyncpa %s122, 1

// kernel: _net_forward_impl.1
$region0: #{_net_forward_impl.1}
  #allocation0 [shape = 'u32[]', space=smem, size = 0x4, offset = 0x4, fixed_abs, tag = 'smem constant byte address 0x4 - core index']
  #allocation1 [shape = 'u32[144,128]{1,0:T(1,128)}', space=vmem, size = 0x12000, scoped, tag = 'internal scratch']
  %s0 = inlined_call_operand.vmem [shape: f32[8,128], index: 0, kind: input, shape index: {}]
  %s1 = inlined_call_operand.vmem [shape: f32[128,128], index: 1, kind: input, shape index: {}]
  %s2 = inlined_call_operand.vmem [shape: f32[128,128], index: 2, kind: input, shape index: {}]
  %s3 = inlined_call_operand.vmem [shape: f32[128,128], index: 3, kind: input, shape index: {}]
  %s4 = inlined_call_operand.vmem [shape: f32[1,128], index: 4, kind: input, shape index: {}]
  %s5 = inlined_call_operand.vmem [shape: f32[1,128], index: 5, kind: input, shape index: {}]
  %s6 = inlined_call_operand.vmem [shape: f32[1,128], index: 6, kind: input, shape index: {}]
  %s7 = inlined_call_operand.vmem [shape: f32[8,128], index: 7, kind: output, shape index: {}]
  %s8 = sld [smem:[#allocation0]]
  $region38: #{_net_forward_impl.1} parent=0
    _
  %s10 = ssub.s32 1, %s8
  %s11 = scalar_select 0, %s10, %s8
  // Predicated region
  $region2: #{_net_forward_impl.1} parent=0 // pred_check
    _
  $region3: #{_net_forward_impl.1} parent=0 // pred_check_branch
    %13 = sbr.rel (0) target = $region5
  $region4: #{_net_forward_impl.1} parent=0 // pred_region
    _
  $region5: #{_net_forward_impl.1} parent=0 // pred_fallthru
    _
  // Predicated region
  $region6: #{_net_forward_impl.1} parent=0 // pred_check
    _
  $region7: #{_net_forward_impl.1} parent=0 // pred_check_branch
    %15 = sbr.rel (0) target = $region9
  $region8: #{_net_forward_impl.1} parent=0 // pred_region
    _
  $region9: #{_net_forward_impl.1} parent=0 // pred_fallthru
    _
  // Predicated region
  $region10: #{_net_forward_impl.1} parent=0 // pred_check
    _
  $region11: #{_net_forward_impl.1} parent=0 // pred_check_branch
    %17 = sbr.rel (0) target = $region13
  $region12: #{_net_forward_impl.1} parent=0 // pred_region
    _
  $region13: #{_net_forward_impl.1} parent=0 // pred_fallthru
    _
  // Predicated region
  $region14: #{_net_forward_impl.1} parent=0 // pred_check
    _
  $region15: #{_net_forward_impl.1} parent=0 // pred_check_branch
    %19 = sbr.rel (0) target = $region17
  $region16: #{_net_forward_impl.1} parent=0 // pred_region
    _
  $region17: #{_net_forward_impl.1} parent=0 // pred_fallthru
    _
  // Predicated region
  $region18: #{_net_forward_impl.1} parent=0 // pred_check
    _
  $region19: #{_net_forward_impl.1} parent=0 // pred_check_branch
    %21 = sbr.rel (0) target = $region21
  $region20: #{_net_forward_impl.1} parent=0 // pred_region
    _
  $region21: #{_net_forward_impl.1} parent=0 // pred_fallthru
    _
  // Predicated region
  $region22: #{_net_forward_impl.1} parent=0 // pred_check
    _
  $region23: #{_net_forward_impl.1} parent=0 // pred_check_branch
    %23 = sbr.rel (0) target = $region25
  $region24: #{_net_forward_impl.1} parent=0 // pred_region
    _
  $region25: #{_net_forward_impl.1} parent=0 // pred_fallthru
    _
  // Predicated region
  $region26: #{_net_forward_impl.1} parent=0 // pred_check
    _
  $region27: #{_net_forward_impl.1} parent=0 // pred_check_branch
    %25 = sbr.rel (0) target = $region29
  $region28: #{_net_forward_impl.1} parent=0 // pred_region
    _
  $region29: #{_net_forward_impl.1} parent=0 // pred_fallthru
    _
  %v26 = vld [vmem:[%s0] sm:$0xff]
  %v27 = vld [vmem:[%s1] sm:$0xff]
  %v28 = vld [vmem:[%s1 + $0x8] sm:$0xff]
  %v29 = vld [vmem:[%s1 + $0x10] sm:$0xff]
  %v30 = vld [vmem:[%s1 + $0x18] sm:$0xff]
  %v31 = vld [vmem:[%s1 + $0x20] sm:$0xff]
  %v32 = vld [vmem:[%s1 + $0x28] sm:$0xff]
  %v33 = vld [vmem:[%s1 + $0x30] sm:$0xff]
  %v34 = vld [vmem:[%s1 + $0x38] sm:$0xff]
  %v35 = vld [vmem:[%s1 + $0x40] sm:$0xff]
  %v36 = vld [vmem:[%s1 + $0x48] sm:$0xff]
  %v37 = vld [vmem:[%s1 + $0x50] sm:$0xff]
  %v38 = vld [vmem:[%s1 + $0x58] sm:$0xff]
  %v39 = vld [vmem:[%s1 + $0x60] sm:$0xff]
  %v40 = vld [vmem:[%s1 + $0x68] sm:$0xff]
  %v41 = vld [vmem:[%s1 + $0x70] sm:$0xff]
  %v42 = vld [vmem:[%s1 + $0x78] sm:$0xff]
  %v43 = vld [vmem:[%s4] sm:$0x1]
  %v45 = vlaneseq
  %v46 = vshrl.u32 %v45, 7
  %v47 = vsub.s32 0, %v46
  %v48 = vrot.slane %v43, %v47
  %50 = vmatprep.subr.mxu0 0.0
  %51 = vmatpush1.msra.mxu0 %v27
  %52 = vmatprep.subr.mxu0 0.0
  %53 = vmatpush1.msra.mxu0 %v28
  %54 = vmatprep.subr.mxu0 0.0
  %55 = vmatpush1.msra.mxu0 %v29
  %56 = vmatprep.subr.mxu0 0.0
  %57 = vmatpush1.msra.mxu0 %v30
  %58 = vmatprep.subr.mxu0 0.0
  %59 = vmatpush1.msra.mxu0 %v31
  %60 = vmatprep.subr.mxu0 0.0
  %61 = vmatpush1.msra.mxu0 %v32
  %62 = vmatprep.subr.mxu0 0.0
  %63 = vmatpush1.msra.mxu0 %v33
  %64 = vmatprep.subr.mxu0 0.0
  %65 = vmatpush1.msra.mxu0 %v34
  %66 = vmatprep.subr.mxu0 0.0
  %67 = vmatpush1.msra.mxu0 %v35
  %68 = vmatprep.subr.mxu0 0.0
  %69 = vmatpush1.msra.mxu0 %v36
  %70 = vmatprep.subr.mxu0 0.0
  %71 = vmatpush1.msra.mxu0 %v37
  %72 = vmatprep.subr.mxu0 0.0
  %73 = vmatpush1.msra.mxu0 %v38
  %74 = vmatprep.subr.mxu0 0.0
  %75 = vmatpush1.msra.mxu0 %v39
  %76 = vmatprep.subr.mxu0 0.0
  %77 = vmatpush1.msra.mxu0 %v40
  %78 = vmatprep.subr.mxu0 0.0
  %79 = vmatpush1.msra.mxu0 %v41
  %80 = vmatprep.subr.mxu0 0.0
  %81 = vmatpush1.msra.mxu0 %v42
  %82 = vmatprep.subr.mxu0 0.0
  %83 = vmatpush1.msra.mxu0 0.0
  %84 = vmatprep.subr.mxu0 0.0
  %85 = vmatpush1.msra.mxu0 0.0
  %86 = vmatprep.subr.mxu0 0.0
  %87 = vmatpush1.msra.mxu0 0.0
  %88 = vmatprep.subr.mxu0 0.0
  %89 = vmatpush1.msra.mxu0 0.0
  %90 = vmatprep.subr.mxu0 0.0
  %91 = vmatpush1.msra.mxu0 0.0
  %92 = vmatprep.subr.mxu0 0.0
  %93 = vmatpush1.msra.mxu0 0.0
  %94 = vmatprep.subr.mxu0 0.0
  %95 = vmatpush1.msra.mxu0 0.0
  %96 = vmatprep.subr.mxu0 0.0
  %97 = vmatpush1.msra.mxu0 0.0
  %98 = vmatprep.subr.mxu0 0.0
  %99 = vmatpush1.msra.mxu0 0.0
  %100 = vmatprep.subr.mxu0 0.0
  %101 = vmatpush1.msra.mxu0 0.0
  %102 = vmatprep.subr.mxu0 0.0
  %103 = vmatpush1.msra.mxu0 0.0
  %104 = vmatprep.subr.mxu0 0.0
  %105 = vmatpush1.msra.mxu0 0.0
  %106 = vmatprep.subr.mxu0 0.0
  %107 = vmatpush1.msra.mxu0 0.0
  %108 = vmatprep.subr.mxu0 0.0
  %109 = vmatpush1.msra.mxu0 0.0
  %110 = vmatprep.subr.mxu0 0.0
  %111 = vmatpush1.msra.mxu0 0.0
  %112 = vmatprep.subr.mxu0 0.0
  %113 = vmatpush1.msra.mxu0 0.0
  %114 = vmatprep.mubr.f32.mxu0 0.0
  %115 = vmatmul.mubr.f32.gmra.mrb[0].mxu0 %v26
  %v116 = vpop.f32.mrb[0].mxu0
  %v117 = vadd.f32 %v48, %v116
  %v118 = vpop.f32.mrb[0].mxu0
  %119 = vdwg.mxu0
  %v120 = vmax.f32 %v117, 0.0
  %v121 = vld [vmem:[%s2] sm:$0xff]
  %v122 = vld [vmem:[%s2 + $0x8] sm:$0xff]
  %v123 = vld [vmem:[%s2 + $0x10] sm:$0xff]
  %v124 = vld [vmem:[%s2 + $0x18] sm:$0xff]
  %v125 = vld [vmem:[%s2 + $0x20] sm:$0xff]
  %v126 = vld [vmem:[%s2 + $0x28] sm:$0xff]
  %v127 = vld [vmem:[%s2 + $0x30] sm:$0xff]
  %v128 = vld [vmem:[%s2 + $0x38] sm:$0xff]
  %v129 = vld [vmem:[%s2 + $0x40] sm:$0xff]
  %v130 = vld [vmem:[%s2 + $0x48] sm:$0xff]
  %v131 = vld [vmem:[%s2 + $0x50] sm:$0xff]
  %v132 = vld [vmem:[%s2 + $0x58] sm:$0xff]
  %v133 = vld [vmem:[%s2 + $0x60] sm:$0xff]
  %v134 = vld [vmem:[%s2 + $0x68] sm:$0xff]
  %v135 = vld [vmem:[%s2 + $0x70] sm:$0xff]
  %v136 = vld [vmem:[%s2 + $0x78] sm:$0xff]
  %v137 = vld [vmem:[%s5] sm:$0x1]
  %v139 = vlaneseq
  %v140 = vshrl.u32 %v139, 7
  %v141 = vsub.s32 0, %v140
  %v142 = vrot.slane %v137, %v141
  %144 = vmatprep.subr.mxu0 0.0
  %145 = vmatpush1.msra.mxu0 %v121
  %146 = vmatprep.subr.mxu0 0.0
  %147 = vmatpush1.msra.mxu0 %v122
  %148 = vmatprep.subr.mxu0 0.0
  %149 = vmatpush1.msra.mxu0 %v123
  %150 = vmatprep.subr.mxu0 0.0
  %151 = vmatpush1.msra.mxu0 %v124
  %152 = vmatprep.subr.mxu0 0.0
  %153 = vmatpush1.msra.mxu0 %v125
  %154 = vmatprep.subr.mxu0 0.0
  %155 = vmatpush1.msra.mxu0 %v126
  %156 = vmatprep.subr.mxu0 0.0
  %157 = vmatpush1.msra.mxu0 %v127
  %158 = vmatprep.subr.mxu0 0.0
  %159 = vmatpush1.msra.mxu0 %v128
  %160 = vmatprep.subr.mxu0 0.0
  %161 = vmatpush1.msra.mxu0 %v129
  %162 = vmatprep.subr.mxu0 0.0
  %163 = vmatpush1.msra.mxu0 %v130
  %164 = vmatprep.subr.mxu0 0.0
  %165 = vmatpush1.msra.mxu0 %v131
  %166 = vmatprep.subr.mxu0 0.0
  %167 = vmatpush1.msra.mxu0 %v132
  %168 = vmatprep.subr.mxu0 0.0
  %169 = vmatpush1.msra.mxu0 %v133
  %170 = vmatprep.subr.mxu0 0.0
  %171 = vmatpush1.msra.mxu0 %v134
  %172 = vmatprep.subr.mxu0 0.0
  %173 = vmatpush1.msra.mxu0 %v135
  %174 = vmatprep.subr.mxu0 0.0
  %175 = vmatpush1.msra.mxu0 %v136
  %176 = vmatprep.subr.mxu0 0.0
  %177 = vmatpush1.msra.mxu0 0.0
  %178 = vmatprep.subr.mxu0 0.0
  %179 = vmatpush1.msra.mxu0 0.0
  %180 = vmatprep.subr.mxu0 0.0
  %181 = vmatpush1.msra.mxu0 0.0
  %182 = vmatprep.subr.mxu0 0.0
  %183 = vmatpush1.msra.mxu0 0.0
  %184 = vmatprep.subr.mxu0 0.0
  %185 = vmatpush1.msra.mxu0 0.0
  %186 = vmatprep.subr.mxu0 0.0
  %187 = vmatpush1.msra.mxu0 0.0
  %188 = vmatprep.subr.mxu0 0.0
  %189 = vmatpush1.msra.mxu0 0.0
  %190 = vmatprep.subr.mxu0 0.0
  %191 = vmatpush1.msra.mxu0 0.0
  %192 = vmatprep.subr.mxu0 0.0
  %193 = vmatpush1.msra.mxu0 0.0
  %194 = vmatprep.subr.mxu0 0.0
  %195 = vmatpush1.msra.mxu0 0.0
  %196 = vmatprep.subr.mxu0 0.0
  %197 = vmatpush1.msra.mxu0 0.0
  %198 = vmatprep.subr.mxu0 0.0
  %199 = vmatpush1.msra.mxu0 0.0
  %200 = vmatprep.subr.mxu0 0.0
  %201 = vmatpush1.msra.mxu0 0.0
  %202 = vmatprep.subr.mxu0 0.0
  %203 = vmatpush1.msra.mxu0 0.0
  %204 = vmatprep.subr.mxu0 0.0
  %205 = vmatpush1.msra.mxu0 0.0
  %206 = vmatprep.subr.mxu0 0.0
  %207 = vmatpush1.msra.mxu0 0.0
  %208 = vmatprep.mubr.f32.mxu0 0.0
  %209 = vmatmul.mubr.f32.gmra.mrb[0].mxu0 %v120
  %v210 = vpop.f32.mrb[0].mxu0
  %v211 = vadd.f32 %v142, %v210
  %v212 = vpop.f32.mrb[0].mxu0
  %213 = vdwg.mxu0
  %v214 = vmax.f32 %v211, 0.0
  %v215 = vld [vmem:[%s3] sm:$0xff]
  %v216 = vld [vmem:[%s3 + $0x8] sm:$0xff]
  %v217 = vld [vmem:[%s3 + $0x10] sm:$0xff]
  %v218 = vld [vmem:[%s3 + $0x18] sm:$0xff]
  %v219 = vld [vmem:[%s3 + $0x20] sm:$0xff]
  %v220 = vld [vmem:[%s3 + $0x28] sm:$0xff]
  %v221 = vld [vmem:[%s3 + $0x30] sm:$0xff]
  %v222 = vld [vmem:[%s3 + $0x38] sm:$0xff]
  %v223 = vld [vmem:[%s3 + $0x40] sm:$0xff]
  %v224 = vld [vmem:[%s3 + $0x48] sm:$0xff]
  %v225 = vld [vmem:[%s3 + $0x50] sm:$0xff]
  %v226 = vld [vmem:[%s3 + $0x58] sm:$0xff]
  %v227 = vld [vmem:[%s3 + $0x60] sm:$0xff]
  %v228 = vld [vmem:[%s3 + $0x68] sm:$0xff]
  %v229 = vld [vmem:[%s3 + $0x70] sm:$0xff]
  %v230 = vld [vmem:[%s3 + $0x78] sm:$0xff]
  %v231 = vld [vmem:[%s6] sm:$0x1]
  %v233 = vlaneseq
  %v234 = vshrl.u32 %v233, 7
  %v235 = vsub.s32 0, %v234
  %v236 = vrot.slane %v231, %v235
  %238 = vmatprep.subr.mxu0 0.0
  %239 = vmatpush1.msra.mxu0 %v215
  %240 = vmatprep.subr.mxu0 0.0
  %241 = vmatpush1.msra.mxu0 %v216
  %242 = vmatprep.subr.mxu0 0.0
  %243 = vmatpush1.msra.mxu0 %v217
  %244 = vmatprep.subr.mxu0 0.0
  %245 = vmatpush1.msra.mxu0 %v218
  %246 = vmatprep.subr.mxu0 0.0
  %247 = vmatpush1.msra.mxu0 %v219
  %248 = vmatprep.subr.mxu0 0.0
  %249 = vmatpush1.msra.mxu0 %v220
  %250 = vmatprep.subr.mxu0 0.0
  %251 = vmatpush1.msra.mxu0 %v221
  %252 = vmatprep.subr.mxu0 0.0
  %253 = vmatpush1.msra.mxu0 %v222
  %254 = vmatprep.subr.mxu0 0.0
  %255 = vmatpush1.msra.mxu0 %v223
  %256 = vmatprep.subr.mxu0 0.0
  %257 = vmatpush1.msra.mxu0 %v224
  %258 = vmatprep.subr.mxu0 0.0
  %259 = vmatpush1.msra.mxu0 %v225
  %260 = vmatprep.subr.mxu0 0.0
  %261 = vmatpush1.msra.mxu0 %v226
  %262 = vmatprep.subr.mxu0 0.0
  %263 = vmatpush1.msra.mxu0 %v227
  %264 = vmatprep.subr.mxu0 0.0
  %265 = vmatpush1.msra.mxu0 %v228
  %266 = vmatprep.subr.mxu0 0.0
  %267 = vmatpush1.msra.mxu0 %v229
  %268 = vmatprep.subr.mxu0 0.0
  %269 = vmatpush1.msra.mxu0 %v230
  %270 = vmatprep.subr.mxu0 0.0
  %271 = vmatpush1.msra.mxu0 0.0
  %272 = vmatprep.subr.mxu0 0.0
  %273 = vmatpush1.msra.mxu0 0.0
  %274 = vmatprep.subr.mxu0 0.0
  %275 = vmatpush1.msra.mxu0 0.0
  %276 = vmatprep.subr.mxu0 0.0
  %277 = vmatpush1.msra.mxu0 0.0
  %278 = vmatprep.subr.mxu0 0.0
  %279 = vmatpush1.msra.mxu0 0.0
  %280 = vmatprep.subr.mxu0 0.0
  %281 = vmatpush1.msra.mxu0 0.0
  %282 = vmatprep.subr.mxu0 0.0
  %283 = vmatpush1.msra.mxu0 0.0
  %284 = vmatprep.subr.mxu0 0.0
  %285 = vmatpush1.msra.mxu0 0.0
  %286 = vmatprep.subr.mxu0 0.0
  %287 = vmatpush1.msra.mxu0 0.0
  %288 = vmatprep.subr.mxu0 0.0
  %289 = vmatpush1.msra.mxu0 0.0
  %290 = vmatprep.subr.mxu0 0.0
  %291 = vmatpush1.msra.mxu0 0.0
  %292 = vmatprep.subr.mxu0 0.0
  %293 = vmatpush1.msra.mxu0 0.0
  %294 = vmatprep.subr.mxu0 0.0
  %295 = vmatpush1.msra.mxu0 0.0
  %296 = vmatprep.subr.mxu0 0.0
  %297 = vmatpush1.msra.mxu0 0.0
  %298 = vmatprep.subr.mxu0 0.0
  %299 = vmatpush1.msra.mxu0 0.0
  %300 = vmatprep.subr.mxu0 0.0
  %301 = vmatpush1.msra.mxu0 0.0
  %302 = vmatprep.mubr.f32.mxu0 0.0
  %303 = vmatmul.mubr.f32.gmra.mrb[0].mxu0 %v214
  %v304 = vpop.f32.mrb[0].mxu0
  %v305 = vadd.f32 %v236, %v304
  %v306 = vpop.f32.mrb[0].mxu0
  %307 = vdwg.mxu0
  %308 = vst [vmem:[%s7] sm:$0xff] %v305
  // Predicated region
  $region30: #{_net_forward_impl.1} parent=0 // pred_check
    _
  $region31: #{_net_forward_impl.1} parent=0 // pred_check_branch
    %310 = sbr.rel (0) target = $region33
  $region32: #{_net_forward_impl.1} parent=0 // pred_region
    _
  $region33: #{_net_forward_impl.1} parent=0 // pred_fallthru
    _
  // Predicated region
  $region34: #{_net_forward_impl.1} parent=0 // pred_check
    _
  $region35: #{_net_forward_impl.1} parent=0 // pred_check_branch
    %312 = sbr.rel (0) target = $region37
  $region36: #{_net_forward_impl.1} parent=0 // pred_region
    _
  $region37: #{_net_forward_impl.1} parent=0 // pred_fallthru
    _

</llo_original>
